<compile_context>
chip_gen: v7x
topology: tpu7x:2x2x1
jax: 0.10.0
libtpu: 0.0.40
codegen_flags: <defaults>
</compile_context>

<pallas_src>
import jax
import jax.numpy as jnp
from jax.experimental import pallas as pl
from jax.experimental.pallas import tpu as pltpu


_TS_MAX = 2048              # max lane width of the 2-D slab (multiple of 128)
_BLOCK_ELEMS = 512 * 2048   # ~4 MiB f32 per output block (per pipeline buffer)


def _cdiv(a, b):
    return (a + b - 1) // b


def _round_up(x, m):
    return ((x + m - 1) // m) * m


def imputation_kernel(tanh_tbl_ref, x_ref, o_ref):
    # tanh_tbl_ref: SMEM f32[3]      -- tanh(embedding rows), precomputed
    # x_ref:        VMEM intN[tb,C]  -- indices in {0, 1, 2}, native dtype
    # o_ref:        VMEM f32[tb,C]   -- gathered tanh values
    xi = x_ref[...].astype(jnp.int32)   # in-register widen; no extra HBM traffic
    t0 = tanh_tbl_ref[0]
    t1 = tanh_tbl_ref[1]
    t2 = tanh_tbl_ref[2]
    # Pure VPU select chain; out-of-range indices fall through to t2.
    o_ref[...] = jnp.where(xi == 0, t0, jnp.where(xi == 1, t1, t2))


def imputation_forward(x, emb_table):
    """x: integer array (any rank) with values in [0, 3).  emb_table: f32 (3, 1).

    Returns f32 x.shape + (1,) = tanh(Embedding(3,1)(x)), matching PyTorch.
    """
    orig_shape = tuple(x.shape)
    total = 1
    for d in orig_shape:
        total *= d

    # 64-bit indices are not supported in VMEM blocks; values fit any width.
    if x.dtype.itemsize == 8:
        x = x.astype(jnp.int32)

    # Hoist tanh: only 3 distinct output values exist.
    tanh_tbl = jnp.tanh(emb_table.reshape(3).astype(jnp.float32))

    # Flatten to a lane-dense 2-D slab.  If total is a multiple of 128 this is
    # a free metadata reshape; otherwise pad the (narrow) index array only.
    flat = x.reshape(-1)
    padded = _round_up(total, 128)
    if padded != total:
        flat = jnp.pad(flat, (0, padded - total))  # pad value 0 is a valid index
    lane_w = 128
    for cand in range(min(_TS_MAX, padded), 127, -128):
        if padded % cand == 0:
            lane_w = cand
            break
    rows = padded // lane_w
    x2d = flat.reshape(rows, lane_w)

    # Balanced row tiles: ~_BLOCK_ELEMS elements per block, multiple of 32 so
    # int8 index blocks satisfy (32,128) tiling; full-dim block for small rows.
    tb_cap = max(32, (_BLOCK_ELEMS // lane_w) // 32 * 32)
    if rows <= tb_cap:
        tb = rows
    else:
        tb = _round_up(_cdiv(rows, _cdiv(rows, tb_cap)), 32)
    grid = (_cdiv(rows, tb),)

    idx_bytes = x2d.dtype.itemsize
    out2d = pl.pallas_call(
        imputation_kernel,
        out_shape=jax.ShapeDtypeStruct((rows, lane_w), jnp.float32),
        grid=grid,
        in_specs=[
            # Tiny tanh'd table lives in SMEM, read as scalars.
            pl.BlockSpec(memory_space=pltpu.MemorySpace.SMEM),
            pl.BlockSpec((tb, lane_w), lambda i: (i, 0)),
        ],
        out_specs=pl.BlockSpec((tb, lane_w), lambda i: (i, 0)),
        compiler_params=pltpu.CompilerParams(
            dimension_semantics=("parallel",),
            vmem_limit_bytes=32 << 20,
        ),
        cost_estimate=pl.CostEstimate(
            flops=0,
            transcendentals=0,
            bytes_accessed=padded * (idx_bytes + 4) + 3 * 4,
        ),
    )(tanh_tbl, x2d)

    out_flat = out2d.reshape(-1)
    if padded != total:
        out_flat = out_flat[:total]
    # PyTorch Embedding appends the embedding dim (=1); kept out of the kernel
    # so stores stay lane-dense.
    return out_flat.reshape(orig_shape + (1,))


if __name__ == "__main__":
    key = jax.random.PRNGKey(0)
    k_emb, k_idx, k_idx2 = jax.random.split(key, 3)

    # nn.Embedding(3, 1) default init: N(0, 1).  Deterministic here.
    emb_table = jax.random.normal(k_emb, (3, 1), dtype=jnp.float32)

    # Main test: int8 indices (optimized narrow-index path), values in {0,1,2}.
    B, S = 8, 128
    x = jax.random.randint(k_idx, (B, S), 0, 3, dtype=jnp.int32).astype(jnp.int8)

    out = imputation_forward(x, emb_table)
    out = jax.block_until_ready(out)

    ref = jnp.tanh(emb_table[x.astype(jnp.int32)])
    assert out.shape == (B, S, 1)
    assert jnp.allclose(out, ref, atol=1e-6), "mismatch vs reference (int8 path)"

    # Secondary test: awkward 3-D int32 shape exercising the pad fallback.
    x2 = jax.random.randint(k_idx2, (2, 5, 7), 0, 3, dtype=jnp.int32)
    out2 = jax.block_until_ready(imputation_forward(x2, emb_table))
    ref2 = jnp.tanh(emb_table[x2])
    assert out2.shape == (2, 5, 7, 1)
    assert jnp.allclose(out2, ref2, atol=1e-6), "mismatch vs reference (pad path)"

    print("KERNEL_OK")
</pallas_src>

<mosaic_0001>
module attributes {stable_mosaic.version = 11 : i64} {
  func.func @imputation_kernel(%arg0: i32, %arg1: memref<3xf32, #tpu.memory_space<smem>>, %arg2: memref<1x1024xi8, #tpu.memory_space<vmem>>, %arg3: memref<1x1024xf32, #tpu.memory_space<vmem>>) attributes {dimension_semantics = [#tpu.dimension_semantics<parallel>], iteration_bounds = array<i64: 1>, scalar_prefetch = 0 : i64, scratch_operands = 0 : i64, tpu.core_type = #tpu.core_type<tc>, window_params = [{transform_indices = @transform_0, window_bounds = array<i64: 3>}, {transform_indices = @transform_1, window_bounds = array<i64: 1, 1024>}, {transform_indices = @transform_2, window_bounds = array<i64: 1, 1024>}]} {
    %c0 = arith.constant 0 : index
    %c0_0 = arith.constant 0 : index
    %0 = vector.load %arg2[%c0, %c0_0] : memref<1x1024xi8, #tpu.memory_space<vmem>>, vector<1x1024xi8>
    %1 = arith.extsi %0 : vector<1x1024xi8> to vector<1x1024xi32>
    %c0_1 = arith.constant 0 : index
    %2 = memref.load %arg1[%c0_1] : memref<3xf32, #tpu.memory_space<smem>>
    %c1 = arith.constant 1 : index
    %3 = memref.load %arg1[%c1] : memref<3xf32, #tpu.memory_space<smem>>
    %c2 = arith.constant 2 : index
    %4 = memref.load %arg1[%c2] : memref<3xf32, #tpu.memory_space<smem>>
    %c0_i32 = arith.constant 0 : i32
    %5 = vector.broadcast %c0_i32 : i32 to vector<1x1024xi32>
    %6 = arith.cmpi eq, %1, %5 : vector<1x1024xi32>
    %c1_i32 = arith.constant 1 : i32
    %7 = vector.broadcast %c1_i32 : i32 to vector<1x1024xi32>
    %8 = arith.cmpi eq, %1, %7 : vector<1x1024xi32>
    %9 = vector.broadcast %3 : f32 to vector<1x1024xf32>
    %10 = vector.broadcast %4 : f32 to vector<1x1024xf32>
    %11 = arith.select %8, %9, %10 : vector<1x1024xi1>, vector<1x1024xf32>
    %12 = vector.broadcast %2 : f32 to vector<1x1024xf32>
    %13 = arith.select %6, %12, %11 : vector<1x1024xi1>, vector<1x1024xf32>
    %c0_2 = arith.constant 0 : index
    %c0_3 = arith.constant 0 : index
    %14 = vector.load %arg3[%c0_2, %c0_3] : memref<1x1024xf32, #tpu.memory_space<vmem>>, vector<1x1024xf32>
    tpu.vector_store %arg3[%c0_2, %c0_3], %13 {strides = array<i32>} : memref<1x1024xf32, #tpu.memory_space<vmem>>, vector<1x1024xf32>,
    return
  }
  func.func @transform_0(%arg0: i32) -> i32 {
    %c0_i32 = arith.constant 0 : i32
    %c0_i32_0 = arith.constant 0 : i32
    return %c0_i32 : i32
  }
  func.func @transform_1(%arg0: i32) -> (i32, i32) {
    %c0_i32 = arith.constant 0 : i32
    %c0_i32_0 = arith.constant 0 : i32
    return %arg0, %c0_i32 : i32, i32
  }
  func.func @transform_2(%arg0: i32) -> (i32, i32) {
    %c0_i32 = arith.constant 0 : i32
    %c0_i32_0 = arith.constant 0 : i32
    return %arg0, %c0_i32 : i32, i32
  }
}

</mosaic_0001>

<llo_original>
// kernel: tpu_custom_call.1
$region0: #{tpu_custom_call.1}
  #allocation0 [shape = 'u32[]', space=smem, size = 0x4, offset = 0x4, fixed_abs, tag = 'smem constant byte address 0x4 - core index']
  #allocation1 [shape = 'u32[144,128]{1,0:T(1,128)}', space=vmem, size = 0x12000, scoped, tag = 'internal scratch']
  %s0 = inlined_call_operand.hbm [shape: f32[3], index: 0, kind: input, shape index: {}]
  %s1 = inlined_call_operand.hbm [shape: s8[1,1024], index: 1, kind: input, shape index: {}]
  %s2 = inlined_call_operand.hbm [shape: f32[1,1024], index: 2, kind: output, shape index: {}]
  %s3 = sld [smem:[#allocation0]]
  $region26: #{tpu_custom_call.1} parent=0
    _
  %s5 = ssub.s32 1, %s3
  %s6 = scalar_select 0, %s5, %s3
  $region1: #{tpu_custom_call.1} parent=0
    #allocation2 [shape = 'u8[512]{0}', space=smem, size = 0x200, scoped, tag = 'input window, operand 0, single buffered']
    #allocation3 [shape = 's32[1]{0}', space=sflag, size = 0x4, scoped, tag = 'scoped memory for tpu_custom_call.1']
    #allocation4 [shape = 's32[1]{0}', space=sflag, size = 0x4, scoped, tag = 'scoped memory for tpu_custom_call.1']
    #allocation5 [shape = 's32[1]{0}', space=sflag, size = 0x4, scoped, tag = 'scoped memory for tpu_custom_call.1']
    #allocation6 [shape = 'u8[4096]{0}', space=vmem, size = 0x1000, scoped, tag = 'input window, operand 1, single buffered']
    #allocation7 [shape = 'u8[4096]{0}', space=vmem, size = 0x1000, scoped, tag = 'output window, operand 0, single buffered']
    %7 = vsyncpa [#allocation5], 0
    %8 = vsyncpa [#allocation3], 0
    %9 = vsyncpa [#allocation4], 0
    // Predicated region
    $region2: #{tpu_custom_call.1} parent=1 // pred_check
      _
    $region3: #{tpu_custom_call.1} parent=1 // pred_check_branch
      %11 = sbr.rel (0) target = $region5
    $region4: #{tpu_custom_call.1} parent=1 // pred_region
      %s13 = ssub.s32 16, 16
      %14 = vsyncadd [#allocation5], %s13
      %17 = dma.hbm_to_smem %s0, 16, [#allocation2], [#allocation5]
    $region5: #{tpu_custom_call.1} parent=1 // pred_fallthru
      _
    // Predicated region
    $region6: #{tpu_custom_call.1} parent=1 // pred_check
      _
    $region7: #{tpu_custom_call.1} parent=1 // pred_check_branch
      %19 = sbr.rel (0) target = $region9
    $region8: #{tpu_custom_call.1} parent=1 // pred_region
      %s21 = ssub.s32 128, 128
      %22 = vsyncadd [#allocation3], %s21
      %s24 = sshll.u32 [#allocation6], 4
      %s25 = int_to_ptr.vmem [resolvable:$true] %s24
      %27 = dma.hbm_to_vmem [thread:$0]  %s1, 128, %s25, [#allocation3]
    $region9: #{tpu_custom_call.1} parent=1 // pred_fallthru
      _
    // Predicated region
    $region10: #{tpu_custom_call.1} parent=1 // pred_check
      _
    $region11: #{tpu_custom_call.1} parent=1 // pred_check_branch
      %29 = sbr.rel (0) target = $region13
    $region12: #{tpu_custom_call.1} parent=1 // pred_region
      %30 = dma.done [#allocation5], 16
    $region13: #{tpu_custom_call.1} parent=1 // pred_fallthru
      _
    // Predicated region
    $region14: #{tpu_custom_call.1} parent=1 // pred_check
      _
    $region15: #{tpu_custom_call.1} parent=1 // pred_check_branch
      %32 = sbr.rel (0) target = $region17
    $region16: #{tpu_custom_call.1} parent=1 // pred_region
      %33 = dma.done [#allocation3], 128
    $region17: #{tpu_custom_call.1} parent=1 // pred_fallthru
      _
    %34 = sfence
    %v35 = vld [vmem:[#allocation6] sm:$0xff]
    %v36 = vunpack.c.0.s8 %v35
    %v37 = vunpack.c.1.s8 %v35
    %v38 = vunpack.c.2.s8 %v35
    %v39 = vunpack.c.3.s8 %v35
    %s40 = sld [smem:[#allocation2]]
    %s41 = sld [smem:[#allocation2 + $0x1]]
    %s42 = sld [smem:[#allocation2 + $0x2]]
    %vm43 = vcmp.eq.s32.totalorder %v36, 0
    %vm44 = vcmp.eq.s32.totalorder %v37, 0
    %vm45 = vcmp.eq.s32.totalorder %v38, 0
    %vm46 = vcmp.eq.s32.totalorder %v39, 0
    %vm47 = vcmp.eq.s32.totalorder %v36, 1
    %vm48 = vcmp.eq.s32.totalorder %v37, 1
    %vm49 = vcmp.eq.s32.totalorder %v38, 1
    %vm50 = vcmp.eq.s32.totalorder %v39, 1
    %v51 = vstv %s41
    %v52 = vstv %s42
    %v53 = vsel %vm47, %v51, %v52
    %v54 = vsel %vm48, %v51, %v52
    %v55 = vsel %vm49, %v51, %v52
    %v56 = vsel %vm50, %v51, %v52
    %v57 = vstv %s40
    %v58 = vsel %vm43, %v57, %v53
    %v59 = vsel %vm44, %v57, %v54
    %v60 = vsel %vm45, %v57, %v55
    %v61 = vsel %vm46, %v57, %v56
    %v67 = vunpack.c.l.s4 1966171168
    %v68 = vunpack.c.0.s8 %v67
    %v69 = vlaneseq
    %v70 = vshrl.u32 %v69, 7
    %v71 = vsub.s32 %v68, %v70
    %v72 = vrot.slane %v58, %v71
    %v74 = vunpack.c.l.s4 1966171168
    %v75 = vunpack.c.0.s8 %v74
    %v76 = vlaneseq
    %v77 = vshrl.u32 %v76, 7
    %v78 = vsub.s32 %v75, %v77
    %v79 = vrot.slane %v59, %v78
    %v81 = vunpack.c.l.s4 1966171168
    %v82 = vunpack.c.0.s8 %v81
    %v83 = vlaneseq
    %v84 = vshrl.u32 %v83, 7
    %v85 = vsub.s32 %v82, %v84
    %v86 = vrot.slane %v60, %v85
    %v88 = vunpack.c.l.s4 1966171168
    %v89 = vunpack.c.0.s8 %v88
    %v90 = vlaneseq
    %v91 = vshrl.u32 %v90, 7
    %v92 = vsub.s32 %v89, %v91
    %v93 = vrot.slane %v61, %v92
    %v94 = vcombine.low %v72, %v79
    %v95 = vcombine.low %v86, %v93
    %v97 = vunpack.c.l.s4 1966171168
    %v98 = vunpack.c.0.s8 %v97
    %v99 = vlaneseq
    %v100 = vshrl.u32 %v99, 7
    %v101 = vsub.s32 %v98, %v100
    %v102 = vrot.slane %v94, %v101
    %v104 = vunpack.c.l.s4 1966171168
    %v105 = vunpack.c.0.s8 %v104
    %v106 = vlaneseq
    %v107 = vshrl.u32 %v106, 7
    %v108 = vsub.s32 %v105, %v107
    %v109 = vrot.slane %v95, %v108
    %v110 = vcombine.low %v102, %v109
    %112 = vst [vmem:[#allocation7] sm:$0xff] %v110
    // Predicated region
    $region18: #{tpu_custom_call.1} parent=1 // pred_check
      _
    $region19: #{tpu_custom_call.1} parent=1 // pred_check_branch
      %114 = sbr.rel (0) target = $region21
    $region20: #{tpu_custom_call.1} parent=1 // pred_region
      %s116 = ssub.s32 128, 128
      %117 = vsyncadd [#allocation4], %s116
      %s119 = sshll.u32 [#allocation7], 4
      %s120 = int_to_ptr.vmem [resolvable:$true] %s119
      %122 = dma.vmem_to_hbm [thread:$0]  %s120, 128, %s2, [#allocation4]
    $region21: #{tpu_custom_call.1} parent=1 // pred_fallthru
      _
    // Predicated region
    $region22: #{tpu_custom_call.1} parent=1 // pred_check
      _
    $region23: #{tpu_custom_call.1} parent=1 // pred_check_branch
      %124 = sbr.rel (0) target = $region25
    $region24: #{tpu_custom_call.1} parent=1 // pred_region
      %125 = dma.done [#allocation4], 128
    $region25: #{tpu_custom_call.1} parent=1 // pred_fallthru
      _
    %126 = vsyncpa [#allocation3], 1
    %127 = vsyncpa [#allocation4], 1
    %128 = vsyncpa [#allocation5], 1

</llo_original>
